<compile_context>
chip_gen: v7x
topology: tpu7x:2x2x1
jax: 0.10.0
libtpu: 0.0.40
codegen_flags: <defaults>
</compile_context>

<pallas_src>
import math
import functools

import jax
import jax.numpy as jnp
from jax import lax
from jax.experimental import pallas as pl
from jax.experimental.pallas import tpu as pltpu


def _qkv_attn_kernel(q_ref, k_ref, v_ref, o_ref, *, scale2, hb):
    # Refs are [Hb, C, TQ] (q/out) and [Hb, C, T] (k/v); Hb is small & static,
    # so unroll the per-head loop (keeps the non-transposed matmul pattern).
    for i in range(hb):
        q = q_ref[i] * scale2  # [C, TQ]  (both ch**-0.25 scales folded into q)
        k = k_ref[i]           # [C, T]
        v = v_ref[i]           # [C, T]

        # logits[t, s] = sum_c q[c, t] * k[c, s]   (contract dim 0 with dim 0)
        w = lax.dot_general(
            q, k,
            dimension_numbers=(((0,), (0,)), ((), ())),
            preferred_element_type=jnp.float32,
        )  # [TQ, T] f32

        # Numerically-stable softmax statistics in f32; normalization deferred.
        w = w - jnp.max(w, axis=-1, keepdims=True)
        e = jnp.exp(w)                 # [TQ, T] unnormalized weights
        s = jnp.sum(e, axis=-1)        # [TQ]    softmax denominators
        p = e.astype(v.dtype)

        # a[c, t] = sum_s v[c, s] * p[t, s]   (contract dim 1 with dim 1)
        a = lax.dot_general(
            v, p,
            dimension_numbers=(((1,), (1,)), ((), ())),
            preferred_element_type=jnp.float32,
        )  # [C, TQ] f32

        # Deferred normalization: scale the small [C, TQ] tile, not [TQ, T].
        inv = 1.0 / s                                  # [TQ]
        o_ref[i] = (a * inv).astype(o_ref.dtype)       # broadcast over C rows


def _vmem_capacity_bytes() -> int:
    try:
        info = pltpu.get_tpu_info()
        cap = getattr(info, "vmem_capacity_bytes", None)
        if cap:
            return int(cap)
    except Exception:
        pass
    return 128 * 1024 * 1024  # v5e / v6e default


def _pick_query_tile(length: int, cap: int) -> int:
    """Query-tile size: full length for small/unaligned T, else <=cap & %128==0."""
    # TODO(synk): pad non-128-aligned large T instead of using the full length.
    if length % 128 != 0 or length <= cap:
        return length
    tq = cap
    while tq > 128 and length % tq != 0:
        tq //= 2
    return tq


def _pick_head_block(n_heads: int, length: int) -> int:
    """Batch several heads per grid step at the small-T UNet levels."""
    if length > 256:
        return 1
    for cand in (8, 4, 2):
        if n_heads % cand == 0:
            return cand
    return 1


def qkv_attention(qkv: jax.Array, n_heads: int) -> jax.Array:
    """
    qkv: [N, 3*H*C, T]  ->  [N, H*C, T]
    Mirrors QKVAttention.forward (chunk into q/k/v first, then view into heads).
    """
    bs, width, length = qkv.shape
    assert width % (3 * n_heads) == 0
    ch = width // (3 * n_heads)
    # torch applies scale = ch**-0.25 to both q and k; fold both into q.
    scale2 = 1.0 / math.sqrt(ch)

    # Free view: [N, 3, H, C, T].  Plane 0/1/2 along dim 1 is q/k/v.
    qkv5 = qkv.reshape(bs, 3, n_heads, ch, length)

    vmem_cap = _vmem_capacity_bytes()
    # v7x has 64 MiB/TC of VMEM -> cap the query tile at 256; 512 elsewhere.
    tq_cap = 256 if vmem_cap <= 64 * 1024 * 1024 else 512
    tq = _pick_query_tile(length, tq_cap)
    n_tq = length // tq

    hb = _pick_head_block(n_heads, length)
    n_hblk = n_heads // hb

    # Leave headroom for compiler scratch; never request more than 96 MiB.
    vmem_limit = min((vmem_cap * 3) // 4, 96 * 1024 * 1024)

    # q / out are tiled along the query axis; K and V keep a constant block
    # index across the query axis so Pallas keeps them VMEM-resident.
    q_spec = pl.BlockSpec((None, None, hb, ch, tq),
                          lambda n, h, t: (n, 0, h, 0, t))
    k_spec = pl.BlockSpec((None, None, hb, ch, length),
                          lambda n, h, t: (n, 1, h, 0, 0))
    v_spec = pl.BlockSpec((None, None, hb, ch, length),
                          lambda n, h, t: (n, 2, h, 0, 0))
    o_spec = pl.BlockSpec((None, hb, ch, tq),
                          lambda n, h, t: (n, h, 0, t))

    # TODO(synk): for T >= 2048 a flash-style streamed-K inner loop would
    # bound the [TQ, T] logits working set further on v7x.
    out = pl.pallas_call(
        functools.partial(_qkv_attn_kernel, scale2=scale2, hb=hb),
        out_shape=jax.ShapeDtypeStruct((bs, n_heads, ch, length), qkv.dtype),
        grid_spec=pltpu.PrefetchScalarGridSpec(
            num_scalar_prefetch=0,
            grid=(bs, n_hblk, n_tq),
            in_specs=[q_spec, k_spec, v_spec],
            out_specs=o_spec,
        ),
        compiler_params=pltpu.CompilerParams(
            # No cross-iteration carry on any axis (each query tile / head /
            # batch element is independent) -> all parallel (v7x megacore).
            dimension_semantics=("parallel", "parallel", "parallel"),
            vmem_limit_bytes=int(vmem_limit),
        ),
    )(qkv5, qkv5, qkv5)

    return out.reshape(bs, n_heads * ch, length)


def qkv_attention_ref(qkv: jax.Array, n_heads: int) -> jax.Array:
    """Pure-JAX reference mirroring the PyTorch forward."""
    bs, width, length = qkv.shape
    ch = width // (3 * n_heads)
    q, k, v = jnp.split(qkv, 3, axis=1)
    scale = 1.0 / math.sqrt(math.sqrt(ch))
    q = q.reshape(bs * n_heads, ch, length) * scale
    k = k.reshape(bs * n_heads, ch, length) * scale
    v = v.reshape(bs * n_heads, ch, length)
    w = jnp.einsum('bct,bcs->bts', q, k)
    w = jax.nn.softmax(w.astype(jnp.float32), axis=-1).astype(w.dtype)
    a = jnp.einsum('bts,bcs->bct', w, v)
    return a.reshape(bs, -1, length)


if __name__ == "__main__":
    # Small shapes: N=2, heads=2, per-head ch=8, T=16  ->  qkv: [2, 48, 16]
    n_heads = 2
    N, ch, T = 2, 8, 16
    key = jax.random.PRNGKey(0)
    qkv = jax.random.normal(key, (N, 3 * n_heads * ch, T), dtype=jnp.float32)

    out = qkv_attention(qkv, n_heads)
    out = jax.block_until_ready(out)

    ref = qkv_attention_ref(qkv, n_heads)
    assert out.shape == (N, n_heads * ch, T)
    assert jnp.allclose(out, ref, atol=1e-5, rtol=1e-5), "mismatch vs reference"

    print("KERNEL_OK")
</pallas_src>

<mosaic_0001>
module attributes {stable_mosaic.version = 11 : i64} {
  func.func @_qkv_attn_kernel(%arg0: i32, %arg1: i32, %arg2: i32, %arg3: memref<1x1x2x8x16xf32, #tpu.memory_space<vmem>>, %arg4: memref<1x1x2x8x16xf32, #tpu.memory_space<vmem>>, %arg5: memref<1x1x2x8x16xf32, #tpu.memory_space<vmem>>, %arg6: memref<1x2x8x16xf32, #tpu.memory_space<vmem>>) attributes {dimension_semantics = [#tpu.dimension_semantics<parallel>, #tpu.dimension_semantics<parallel>, #tpu.dimension_semantics<parallel>], iteration_bounds = array<i64: 2, 1, 1>, scalar_prefetch = 0 : i64, scratch_operands = 0 : i64, tpu.core_type = #tpu.core_type<tc>, window_params = [{transform_indices = @transform_0, window_bounds = array<i64: 1, 1, 2, 8, 16>}, {transform_indices = @transform_1, window_bounds = array<i64: 1, 1, 2, 8, 16>}, {transform_indices = @transform_2, window_bounds = array<i64: 1, 1, 2, 8, 16>}, {transform_indices = @transform_3, window_bounds = array<i64: 1, 2, 8, 16>}]} {
    %c0 = arith.constant 0 : index
    %c0_0 = arith.constant 0 : index
    %c0_1 = arith.constant 0 : index
    %c0_2 = arith.constant 0 : index
    %c0_3 = arith.constant 0 : index
    %0 = vector.load %arg3[%c0, %c0_0, %c0_1, %c0_2, %c0_3] : memref<1x1x2x8x16xf32, #tpu.memory_space<vmem>>, vector<1x1x1x8x16xf32>
    %1 = vector.shape_cast %0 : vector<1x1x1x8x16xf32> to vector<8x16xf32>
    %cst = arith.constant 0.353553385 : f32
    %2 = vector.broadcast %cst : f32 to vector<8x16xf32>
    %3 = arith.mulf %1, %2 : vector<8x16xf32>
    %c0_4 = arith.constant 0 : index
    %c0_5 = arith.constant 0 : index
    %c0_6 = arith.constant 0 : index
    %c0_7 = arith.constant 0 : index
    %c0_8 = arith.constant 0 : index
    %4 = vector.load %arg4[%c0_4, %c0_5, %c0_6, %c0_7, %c0_8] : memref<1x1x2x8x16xf32, #tpu.memory_space<vmem>>, vector<1x1x1x8x16xf32>
    %5 = vector.shape_cast %4 : vector<1x1x1x8x16xf32> to vector<8x16xf32>
    %c0_9 = arith.constant 0 : index
    %c0_10 = arith.constant 0 : index
    %c0_11 = arith.constant 0 : index
    %c0_12 = arith.constant 0 : index
    %c0_13 = arith.constant 0 : index
    %6 = vector.load %arg5[%c0_9, %c0_10, %c0_11, %c0_12, %c0_13] : memref<1x1x2x8x16xf32, #tpu.memory_space<vmem>>, vector<1x1x1x8x16xf32>
    %7 = vector.shape_cast %6 : vector<1x1x1x8x16xf32> to vector<8x16xf32>
    %cst_14 = arith.constant dense<0.000000e+00> : vector<16x16xf32>
    %8 = tpu.matmul %3, %5, %cst_14 {dimension_numbers = #tpu.dot_dimension_numbers<[0], [0], [1], [1], [0, 1, 1, 1], [], []>} : vector<8x16xf32>, vector<8x16xf32>, vector<16x16xf32> -> vector<16x16xf32>
    %cst_15 = arith.constant dense<0xFF800000> : vector<16xf32>
    %9 = vector.multi_reduction <maximumf>, %8, %cst_15 [1] : vector<16x16xf32> to vector<16xf32>
    %10 = vector.shape_cast %9 : vector<16xf32> to vector<16x1xf32>
    %11 = vector.broadcast %10 : vector<16x1xf32> to vector<16x16xf32>
    %12 = arith.subf %8, %11 : vector<16x16xf32>
    %13 = math.exp %12 : vector<16x16xf32>
    %cst_16 = arith.constant dense<0.000000e+00> : vector<16xf32>
    %14 = vector.multi_reduction <add>, %13, %cst_16 [1] : vector<16x16xf32> to vector<16xf32>
    %cst_17 = arith.constant dense<0.000000e+00> : vector<8x16xf32>
    %15 = tpu.matmul %7, %13, %cst_17 {dimension_numbers = #tpu.dot_dimension_numbers<[1], [1], [0], [0], [0, 0, 1, 0], [], []>} : vector<8x16xf32>, vector<16x16xf32>, vector<8x16xf32> -> vector<8x16xf32>
    %cst_18 = arith.constant 1.000000e+00 : f32
    %16 = vector.broadcast %cst_18 : f32 to vector<16xf32>
    %17 = arith.divf %16, %14 : vector<16xf32>
    %18 = vector.shape_cast %17 : vector<16xf32> to vector<1x16xf32>
    %19 = vector.broadcast %18 : vector<1x16xf32> to vector<8x16xf32>
    %20 = arith.mulf %15, %19 : vector<8x16xf32>
    %c0_19 = arith.constant 0 : index
    %c0_20 = arith.constant 0 : index
    %c0_21 = arith.constant 0 : index
    %c0_22 = arith.constant 0 : index
    %21 = vector.load %arg6[%c0_19, %c0_20, %c0_21, %c0_22] : memref<1x2x8x16xf32, #tpu.memory_space<vmem>>, vector<1x1x8x16xf32>
    %22 = vector.shape_cast %21 : vector<1x1x8x16xf32> to vector<8x16xf32>
    %23 = vector.shape_cast %20 : vector<8x16xf32> to vector<1x1x8x16xf32>
    tpu.vector_store %arg6[%c0_19, %c0_20, %c0_21, %c0_22], %23 {strides = array<i32>} : memref<1x2x8x16xf32, #tpu.memory_space<vmem>>, vector<1x1x8x16xf32>,
    %c0_23 = arith.constant 0 : index
    %c0_24 = arith.constant 0 : index
    %c1 = arith.constant 1 : index
    %c0_25 = arith.constant 0 : index
    %c0_26 = arith.constant 0 : index
    %24 = vector.load %arg3[%c0_23, %c0_24, %c1, %c0_25, %c0_26] : memref<1x1x2x8x16xf32, #tpu.memory_space<vmem>>, vector<1x1x1x8x16xf32>
    %25 = vector.shape_cast %24 : vector<1x1x1x8x16xf32> to vector<8x16xf32>
    %cst_27 = arith.constant 0.353553385 : f32
    %26 = vector.broadcast %cst_27 : f32 to vector<8x16xf32>
    %27 = arith.mulf %25, %26 : vector<8x16xf32>
    %c0_28 = arith.constant 0 : index
    %c0_29 = arith.constant 0 : index
    %c1_30 = arith.constant 1 : index
    %c0_31 = arith.constant 0 : index
    %c0_32 = arith.constant 0 : index
    %28 = vector.load %arg4[%c0_28, %c0_29, %c1_30, %c0_31, %c0_32] : memref<1x1x2x8x16xf32, #tpu.memory_space<vmem>>, vector<1x1x1x8x16xf32>
    %29 = vector.shape_cast %28 : vector<1x1x1x8x16xf32> to vector<8x16xf32>
    %c0_33 = arith.constant 0 : index
    %c0_34 = arith.constant 0 : index
    %c1_35 = arith.constant 1 : index
    %c0_36 = arith.constant 0 : index
    %c0_37 = arith.constant 0 : index
    %30 = vector.load %arg5[%c0_33, %c0_34, %c1_35, %c0_36, %c0_37] : memref<1x1x2x8x16xf32, #tpu.memory_space<vmem>>, vector<1x1x1x8x16xf32>
    %31 = vector.shape_cast %30 : vector<1x1x1x8x16xf32> to vector<8x16xf32>
    %cst_38 = arith.constant dense<0.000000e+00> : vector<16x16xf32>
    %32 = tpu.matmul %27, %29, %cst_38 {dimension_numbers = #tpu.dot_dimension_numbers<[0], [0], [1], [1], [0, 1, 1, 1], [], []>} : vector<8x16xf32>, vector<8x16xf32>, vector<16x16xf32> -> vector<16x16xf32>
    %cst_39 = arith.constant dense<0xFF800000> : vector<16xf32>
    %33 = vector.multi_reduction <maximumf>, %32, %cst_39 [1] : vector<16x16xf32> to vector<16xf32>
    %34 = vector.shape_cast %33 : vector<16xf32> to vector<16x1xf32>
    %35 = vector.broadcast %34 : vector<16x1xf32> to vector<16x16xf32>
    %36 = arith.subf %32, %35 : vector<16x16xf32>
    %37 = math.exp %36 : vector<16x16xf32>
    %cst_40 = arith.constant dense<0.000000e+00> : vector<16xf32>
    %38 = vector.multi_reduction <add>, %37, %cst_40 [1] : vector<16x16xf32> to vector<16xf32>
    %cst_41 = arith.constant dense<0.000000e+00> : vector<8x16xf32>
    %39 = tpu.matmul %31, %37, %cst_41 {dimension_numbers = #tpu.dot_dimension_numbers<[1], [1], [0], [0], [0, 0, 1, 0], [], []>} : vector<8x16xf32>, vector<16x16xf32>, vector<8x16xf32> -> vector<8x16xf32>
    %cst_42 = arith.constant 1.000000e+00 : f32
    %40 = vector.broadcast %cst_42 : f32 to vector<16xf32>
    %41 = arith.divf %40, %38 : vector<16xf32>
    %42 = vector.shape_cast %41 : vector<16xf32> to vector<1x16xf32>
    %43 = vector.broadcast %42 : vector<1x16xf32> to vector<8x16xf32>
    %44 = arith.mulf %39, %43 : vector<8x16xf32>
    %c0_43 = arith.constant 0 : index
    %c1_44 = arith.constant 1 : index
    %c0_45 = arith.constant 0 : index
    %c0_46 = arith.constant 0 : index
    %45 = vector.load %arg6[%c0_43, %c1_44, %c0_45, %c0_46] : memref<1x2x8x16xf32, #tpu.memory_space<vmem>>, vector<1x1x8x16xf32>
    %46 = vector.shape_cast %45 : vector<1x1x8x16xf32> to vector<8x16xf32>
    %47 = vector.shape_cast %44 : vector<8x16xf32> to vector<1x1x8x16xf32>
    tpu.vector_store %arg6[%c0_43, %c1_44, %c0_45, %c0_46], %47 {strides = array<i32>} : memref<1x2x8x16xf32, #tpu.memory_space<vmem>>, vector<1x1x8x16xf32>,
    return
  }
  func.func @transform_0(%arg0: i32, %arg1: i32, %arg2: i32) -> (i32, i32, i32, i32, i32) {
    %c0_i32 = arith.constant 0 : i32
    %c0_i32_0 = arith.constant 0 : i32
    %c0_i32_1 = arith.constant 0 : i32
    return %arg0, %c0_i32, %arg1, %c0_i32_0, %arg2 : i32, i32, i32, i32, i32
  }
  func.func @transform_1(%arg0: i32, %arg1: i32, %arg2: i32) -> (i32, i32, i32, i32, i32) {
    %c1_i32 = arith.constant 1 : i32
    %c0_i32 = arith.constant 0 : i32
    %c0_i32_0 = arith.constant 0 : i32
    %c0_i32_1 = arith.constant 0 : i32
    return %arg0, %c1_i32, %arg1, %c0_i32, %c0_i32_0 : i32, i32, i32, i32, i32
  }
  func.func @transform_2(%arg0: i32, %arg1: i32, %arg2: i32) -> (i32, i32, i32, i32, i32) {
    %c2_i32 = arith.constant 2 : i32
    %c0_i32 = arith.constant 0 : i32
    %c0_i32_0 = arith.constant 0 : i32
    %c0_i32_1 = arith.constant 0 : i32
    return %arg0, %c2_i32, %arg1, %c0_i32, %c0_i32_0 : i32, i32, i32, i32, i32
  }
  func.func @transform_3(%arg0: i32, %arg1: i32, %arg2: i32) -> (i32, i32, i32, i32) {
    %c0_i32 = arith.constant 0 : i32
    %c0_i32_0 = arith.constant 0 : i32
    return %arg0, %arg1, %c0_i32, %arg2 : i32, i32, i32, i32
  }
}

</mosaic_0001>

<llo_original>
// kernel: tpu_custom_call.1
$region0: #{tpu_custom_call.1}
  #allocation0 [shape = 'u32[]', space=smem, size = 0x4, offset = 0x4, fixed_abs, tag = 'smem constant byte address 0x4 - core index']
  #allocation1 [shape = 'u32[144,128]{1,0:T(1,128)}', space=vmem, size = 0x12000, scoped, tag = 'internal scratch']
  %s0 = inlined_call_operand.hbm [shape: f32[2,3,2,8,16], index: 0, kind: input, shape index: {}]
  %s1 = inlined_call_operand.hbm [shape: f32[2,3,2,8,16], index: 1, kind: input, shape index: {}]
  %s2 = inlined_call_operand.hbm [shape: f32[2,3,2,8,16], index: 2, kind: input, shape index: {}]
  %s3 = inlined_call_operand.hbm [shape: f32[2,2,8,16], index: 3, kind: output, shape index: {}]
  %s4 = sld [smem:[#allocation0]]
  $region57: #{tpu_custom_call.1} parent=0
    _
  %s6 = ssub.s32 1, %s4
  %s7 = scalar_select 0, %s6, %s4
  $region1: #{tpu_custom_call.1} parent=0
    #allocation2 [shape = 'u8[16384]{0}', space=vmem, size = 0x4000, scoped, tag = 'input window, operand 0']
    #allocation3 [shape = 's32[2]{0}', space=sflag, size = 0x8, scoped, tag = 'scoped memory for tpu_custom_call.1']
    #allocation4 [shape = 's32[2]{0}', space=sflag, size = 0x8, scoped, tag = 'scoped memory for tpu_custom_call.1']
    #allocation5 [shape = 'u8[16384]{0}', space=vmem, size = 0x4000, scoped, tag = 'input window, operand 1']
    #allocation6 [shape = 's32[2]{0}', space=sflag, size = 0x8, scoped, tag = 'scoped memory for tpu_custom_call.1']
    #allocation7 [shape = 'u8[16384]{0}', space=vmem, size = 0x4000, scoped, tag = 'input window, operand 2']
    #allocation8 [shape = 'u8[16384]{0}', space=vmem, size = 0x4000, scoped, tag = 'output window, operand 0']
    %8 = vsyncpa [#allocation3], 0
    %s9 = scalar_lea.sflag [#allocation3], 1
    %10 = vsyncpa %s9, 0
    %11 = vsyncpa [#allocation6], 0
    %s12 = scalar_lea.sflag [#allocation6], 1
    %13 = vsyncpa %s12, 0
    %14 = vsyncpa [#allocation4], 0
    %s15 = scalar_lea.sflag [#allocation4], 1
    %16 = vsyncpa %s15, 0
    loop: start=0, step=1, limit=4
    $region2: #{tpu_custom_call.1} parent=1 // loop_pre_header
      _
    $region3: #{tpu_custom_call.1} parent=1 // loop_header
      %s18 = sphi 0, %s22
      %p19 = scmp.ge.s32.totalorder %s18, 4
      %s25 = sphi 0, %s44
      %s26 = sphi 0, %s40
      %s27 = sphi 0, %s36
      %s28 = sphi 0, %s25
      %s29 = sphi 0, %s26
      %s30 = sphi 0, %s27
      %s31 = sphi 0, %s28
      %s32 = sphi 0, %s29
      %s33 = sphi 0, %s30
      %s51 = sphi 0, %s53
      %s54 = sphi 0, %s51
      %s55 = sphi 0, %s54
      %s71 = sphi 0, %s55
      %s79 = sphi 0, %s81
      %s82 = sphi 0, %s79
      %s83 = sphi 0, %s82
      %s99 = sphi 0, %s83
      %s107 = sphi 0, %s109
      %s110 = sphi 0, %s107
      %s111 = sphi 0, %s110
      %s127 = sphi 0, %s111
      %s137 = sphi 0, %s139
      %s140 = sphi 0, %s137
      %s141 = sphi 0, %s140
      %s157 = sphi 0, %s141
    $region4: #{tpu_custom_call.1} parent=1 // loop_header_branch
      %21 = sbr.rel (%p19) target = $region8
    $region5: #{tpu_custom_call.1} parent=1 // loop_body
      %s23 = ssub.s32 %s18, 1
      %s24 = ssub.s32 %s18, 2
      %s34 = sadd.s32 1, %s27
      %p35 = scmp.ge.s32.totalorder %s34, 1
      %s36 = scalar_select %p35, 0, %s34
      %s37 = sadd.s32 1, %s26
      %s38 = scalar_select %p35, %s37, %s26
      %p39 = scmp.ge.s32.totalorder %s38, 1
      %s40 = scalar_select %p39, 0, %s38
      %s41 = sadd.s32 1, %s25
      %s42 = scalar_select %p39, %s41, %s25
      %p43 = scmp.ge.s32.totalorder %s42, 2
      %s44 = scalar_select %p43, 0, %s42
      %s45 = ssub.s32 %s25, %s44
      %s46 = ssub.s32 %s26, %s40
      %s47 = sor.u32 %s45, %s46
      %s48 = ssub.s32 %s27, %s36
      %s49 = sor.u32 %s47, %s48
      %p50 = scmp.eq.s32.totalorder %s49, 0
      %s52 = sadd.s32 %s51, 1
      %s53 = scalar_select %p50, %s51, %s52
      %p56 = pneg %p50
      %p57 = scmp.eq.s32.totalorder %s18, 1
      %p58 = por %p56, %p57
      %p59 = scmp.ne.s32.totalorder %s51, %s54
      %p60 = scmp.eq.s32.totalorder %s18, 0
      %p61 = por %p59, %p60
      %p62 = scmp.ne.s32.totalorder %s51, %s54
      %p63 = scmp.eq.s32.totalorder %s23, 1
      %p64 = por %p62, %p63
      %p65 = scmp.ne.s32.totalorder %s54, %s55
      %p66 = scmp.eq.s32.totalorder %s23, 0
      %p67 = por %p65, %p66
      %p68 = scmp.ne.s32.totalorder %s54, %s55
      %p69 = scmp.eq.s32.totalorder %s24, 1
      %p70 = por %p68, %p69
      %p72 = scmp.ne.s32.totalorder %s55, %s71
      %p73 = scmp.eq.s32.totalorder %s24, 0
      %p74 = por %p72, %p73
      %s75 = ssub.s32 %s25, %s44
      %s76 = ssub.s32 %s26, %s40
      %s77 = sor.u32 %s75, %s76
      %p78 = scmp.eq.s32.totalorder %s77, 0
      %s80 = sadd.s32 %s79, 1
      %s81 = scalar_select %p78, %s79, %s80
      %p84 = pneg %p78
      %p85 = scmp.eq.s32.totalorder %s18, 1
      %p86 = por %p84, %p85
      %p87 = scmp.ne.s32.totalorder %s79, %s82
      %p88 = scmp.eq.s32.totalorder %s18, 0
      %p89 = por %p87, %p88
      %p90 = scmp.ne.s32.totalorder %s79, %s82
      %p91 = scmp.eq.s32.totalorder %s23, 1
      %p92 = por %p90, %p91
      %p93 = scmp.ne.s32.totalorder %s82, %s83
      %p94 = scmp.eq.s32.totalorder %s23, 0
      %p95 = por %p93, %p94
      %p96 = scmp.ne.s32.totalorder %s82, %s83
      %p97 = scmp.eq.s32.totalorder %s24, 1
      %p98 = por %p96, %p97
      %p100 = scmp.ne.s32.totalorder %s83, %s99
      %p101 = scmp.eq.s32.totalorder %s24, 0
      %p102 = por %p100, %p101
      %s103 = ssub.s32 %s25, %s44
      %s104 = ssub.s32 %s26, %s40
      %s105 = sor.u32 %s103, %s104
      %p106 = scmp.eq.s32.totalorder %s105, 0
      %s108 = sadd.s32 %s107, 1
      %s109 = scalar_select %p106, %s107, %s108
      %p112 = pneg %p106
      %p113 = scmp.eq.s32.totalorder %s18, 1
      %p114 = por %p112, %p113
      %p115 = scmp.ne.s32.totalorder %s107, %s110
      %p116 = scmp.eq.s32.totalorder %s18, 0
      %p117 = por %p115, %p116
      %p118 = scmp.ne.s32.totalorder %s107, %s110
      %p119 = scmp.eq.s32.totalorder %s23, 1
      %p120 = por %p118, %p119
      %p121 = scmp.ne.s32.totalorder %s110, %s111
      %p122 = scmp.eq.s32.totalorder %s23, 0
      %p123 = por %p121, %p122
      %p124 = scmp.ne.s32.totalorder %s110, %s111
      %p125 = scmp.eq.s32.totalorder %s24, 1
      %p126 = por %p124, %p125
      %p128 = scmp.ne.s32.totalorder %s111, %s127
      %p129 = scmp.eq.s32.totalorder %s24, 0
      %p130 = por %p128, %p129
      %s131 = ssub.s32 %s25, %s44
      %s132 = ssub.s32 %s26, %s40
      %s133 = sor.u32 %s131, %s132
      %s134 = ssub.s32 %s27, %s36
      %s135 = sor.u32 %s133, %s134
      %p136 = scmp.eq.s32.totalorder %s135, 0
      %s138 = sadd.s32 %s137, 1
      %s139 = scalar_select %p136, %s137, %s138
      %p142 = pneg %p136
      %p143 = scmp.eq.s32.totalorder %s18, 1
      %p144 = por %p142, %p143
      %p145 = scmp.ne.s32.totalorder %s137, %s140
      %p146 = scmp.eq.s32.totalorder %s18, 0
      %p147 = por %p145, %p146
      %p148 = scmp.ne.s32.totalorder %s137, %s140
      %p149 = scmp.eq.s32.totalorder %s23, 1
      %p150 = por %p148, %p149
      %p151 = scmp.ne.s32.totalorder %s140, %s141
      %p152 = scmp.eq.s32.totalorder %s23, 0
      %p153 = por %p151, %p152
      %p154 = scmp.ne.s32.totalorder %s140, %s141
      %p155 = scmp.eq.s32.totalorder %s24, 1
      %p156 = por %p154, %p155
      %p158 = scmp.ne.s32.totalorder %s141, %s157
      %p159 = scmp.eq.s32.totalorder %s24, 0
      %p160 = por %p158, %p159
      %p161 = scmp.le.s32.totalorder 1, %s18
      %p162 = scmp.lt.s32.totalorder %s18, 3
      %p163 = pnand %p161, %p162
      %p164 = pneg %p163
      // Predicated region
      $region9: #{tpu_custom_call.1} parent=5 // pred_check
        _
      $region10: #{tpu_custom_call.1} parent=5 // pred_check_branch
        %166 = sbr.rel (%p163) target = $region12
      $region11: #{tpu_custom_call.1} parent=5 // pred_region
        %s167 = ssub.s32 %s18, 1
      $region12: #{tpu_custom_call.1} parent=5 // pred_fallthru
        _
      %p168 = scmp.lt.s32.totalorder %s18, 2
      // Predicated region
      $region13: #{tpu_custom_call.1} parent=5 // pred_check
        %p169 = pneg %p168
      $region14: #{tpu_custom_call.1} parent=5 // pred_check_branch
        %171 = sbr.rel (%p169) target = $region16
      $region15: #{tpu_custom_call.1} parent=5 // pred_region
        // Predicated region
        $region17: #{tpu_custom_call.1} parent=15 // pred_check
          %p172 = pneg %p61
        $region18: #{tpu_custom_call.1} parent=15 // pred_check_branch
          %174 = sbr.rel (%p172) target = $region20
        $region19: #{tpu_custom_call.1} parent=15 // pred_region
          %s175 = sand.u32 %s51, 1
          %s176 = scalar_lea.sflag [#allocation3], %s175
          %s177 = sand.u32 %s51, 1
          %s178 = smul.addr %s177, 16
          %s179 = scalar_lea.vmem [#allocation2], %s178
          %s180 = smul.u32 2, %s26
          %s182 = ssub.s32 256, 256
          %183 = vsyncadd %s176, %s182
          %s184 = sadd.s32 %s27, %s180
          %s185 = smul.addr %s25, 6
          %s186 = sadd.s32 %s184, %s185
          %s187 = smul.addr %s186, 128
          %s188 = scalar_lea.hbm %s0, %s187
          %s189 = sshll.u32 %s179, 4
          %s190 = int_to_ptr.vmem [resolvable:$true] %s189
          %195 = dma.hbm_to_vmem [thread:$0]  %s188, 256, %s190, %s176, 128, 128, 8
        $region20: #{tpu_custom_call.1} parent=15 // pred_fallthru
          _
        // Predicated region
        $region21: #{tpu_custom_call.1} parent=15 // pred_check
          %p196 = pneg %p89
        $region22: #{tpu_custom_call.1} parent=15 // pred_check_branch
          %198 = sbr.rel (%p196) target = $region24
        $region23: #{tpu_custom_call.1} parent=15 // pred_region
          %s199 = sand.u32 %s18, 1
          %s200 = scalar_lea.sflag [#allocation6], %s199
          %s201 = sand.u32 %s79, 1
          %s202 = smul.addr %s201, 16
          %s203 = scalar_lea.vmem [#allocation5], %s202
          %s204 = smul.u32 2, %s26
          %s206 = ssub.s32 256, 256
          %207 = vsyncadd %s200, %s206
          %s208 = sadd.s32 %s204, 2
          %s209 = smul.addr %s25, 6
          %s210 = sadd.s32 %s208, %s209
          %s211 = smul.addr %s210, 128
          %s212 = scalar_lea.hbm %s1, %s211
          %s213 = sshll.u32 %s203, 4
          %s214 = int_to_ptr.vmem [resolvable:$true] %s213
          %219 = dma.hbm_to_vmem [thread:$0]  %s212, 256, %s214, %s200, 128, 128, 8
        $region24: #{tpu_custom_call.1} parent=15 // pred_fallthru
          _
        // Predicated region
        $region25: #{tpu_custom_call.1} parent=15 // pred_check
          %p220 = pneg %p117
        $region26: #{tpu_custom_call.1} parent=15 // pred_check_branch
          %222 = sbr.rel (%p220) target = $region28
        $region27: #{tpu_custom_call.1} parent=15 // pred_region
          %s223 = sand.u32 %s18, 1
          %s224 = scalar_lea.sflag [#allocation6], %s223
          %s225 = sand.u32 %s107, 1
          %s226 = smul.addr %s225, 16
          %s227 = scalar_lea.vmem [#allocation7], %s226
          %s228 = smul.u32 2, %s26
          %s230 = ssub.s32 256, 256
          %231 = vsyncadd %s224, %s230
          %s232 = sadd.s32 %s228, 4
          %s233 = smul.addr %s25, 6
          %s234 = sadd.s32 %s232, %s233
          %s235 = smul.addr %s234, 128
          %s236 = scalar_lea.hbm %s2, %s235
          %s237 = sshll.u32 %s227, 4
          %s238 = int_to_ptr.vmem [resolvable:$true] %s237
          %243 = dma.hbm_to_vmem [thread:$0]  %s236, 256, %s238, %s224, 128, 128, 8
        $region28: #{tpu_custom_call.1} parent=15 // pred_fallthru
          _
      $region16: #{tpu_custom_call.1} parent=5 // pred_fallthru
        _
      %p244 = scmp.le.s32.totalorder 1, %s18
      %p245 = scmp.lt.s32.totalorder %s18, 3
      %p246 = pnand %p244, %p245
      %p247 = pneg %p246
      // Predicated region
      $region29: #{tpu_custom_call.1} parent=5 // pred_check
        _
      $region30: #{tpu_custom_call.1} parent=5 // pred_check_branch
        %249 = sbr.rel (%p246) target = $region32
      $region31: #{tpu_custom_call.1} parent=5 // pred_region
        %s250 = ssub.s32 %s18, 1
        %s251 = sand.u32 %s54, 1
        %s252 = scalar_lea.sflag [#allocation3], %s251
        %s253 = sand.u32 %s54, 1
        %s254 = smul.addr %s253, 16
        %s255 = scalar_lea.vmem [#allocation2], %s254
        // Predicated region
        $region33: #{tpu_custom_call.1} parent=31 // pred_check
          %p256 = pneg %p67
        $region34: #{tpu_custom_call.1} parent=31 // pred_check_branch
          %258 = sbr.rel (%p256) target = $region36
        $region35: #{tpu_custom_call.1} parent=31 // pred_region
          %259 = dma.done %s252, 256
        $region36: #{tpu_custom_call.1} parent=31 // pred_fallthru
          _
        %s260 = sand.u32 %s23, 1
        %s261 = scalar_lea.sflag [#allocation6], %s260
        %s262 = sand.u32 %s82, 1
        %s263 = smul.addr %s262, 16
        %s264 = scalar_lea.vmem [#allocation5], %s263
        // Predicated region
        $region37: #{tpu_custom_call.1} parent=31 // pred_check
          %p265 = pneg %p95
        $region38: #{tpu_custom_call.1} parent=31 // pred_check_branch
          %267 = sbr.rel (%p265) target = $region40
        $region39: #{tpu_custom_call.1} parent=31 // pred_region
          %268 = dma.done %s261, 256
        $region40: #{tpu_custom_call.1} parent=31 // pred_fallthru
          _
        %s269 = sand.u32 %s23, 1
        %s270 = scalar_lea.sflag [#allocation6], %s269
        %s271 = sand.u32 %s110, 1
        %s272 = smul.addr %s271, 16
        %s273 = scalar_lea.vmem [#allocation7], %s272
        // Predicated region
        $region41: #{tpu_custom_call.1} parent=31 // pred_check
          %p274 = pneg %p123
        $region42: #{tpu_custom_call.1} parent=31 // pred_check_branch
          %276 = sbr.rel (%p274) target = $region44
        $region43: #{tpu_custom_call.1} parent=31 // pred_region
          %277 = dma.done %s270, 256
        $region44: #{tpu_custom_call.1} parent=31 // pred_fallthru
          _
        %s278 = sand.u32 %s54, 1
        %s279 = scalar_lea.sflag [#allocation3], %s278
        %s280 = sand.u32 %s54, 1
        %s281 = smul.addr %s280, 16
        %s282 = scalar_lea.vmem [#allocation2], %s281
        %p283 = pneg %p67
        %p284 = pneg %p64
        %s285 = sand.u32 %s23, 1
        %s286 = scalar_lea.sflag [#allocation6], %s285
        %s287 = sand.u32 %s82, 1
        %s288 = smul.addr %s287, 16
        %s289 = scalar_lea.vmem [#allocation5], %s288
        %p290 = pneg %p95
        %p291 = pneg %p92
        %s292 = sand.u32 %s23, 1
        %s293 = scalar_lea.sflag [#allocation6], %s292
        %s294 = sand.u32 %s110, 1
        %s295 = smul.addr %s294, 16
        %s296 = scalar_lea.vmem [#allocation7], %s295
        %p297 = pneg %p123
        %p298 = pneg %p120
        %p299 = pneg %p153
        %p300 = pneg %p150
        %s301 = sand.u32 %s140, 1
        %s302 = scalar_lea.sflag [#allocation4], %s301
        %s303 = sand.u32 %s140, 1
        %s304 = smul.addr %s303, 16
        %s305 = scalar_lea.vmem [#allocation8], %s304
        %s306 = smul.u32 2, %s29
        %s307 = smul.u32 2, %s29
        %s308 = smul.u32 2, %s29
        %s309 = smul.u32 2, %s29
        %v310 = vld [vmem:[%s255] sm:$0xff]
        %v311 = vmul.f32 %v310, 0.35355338
        %v312 = vld [vmem:[%s264] sm:$0xff]
        %v313 = vld [vmem:[%s273] sm:$0xff]
        %314 = vxpose.xlu0.b32.start [1/16] %v311, 128
        %315 = vxpose.xlu0.b32.cont [2/16] 0.0, 128
        %316 = vxpose.xlu0.b32.cont [3/16] 0.0, 128
        %317 = vxpose.xlu0.b32.cont [4/16] 0.0, 128
        %318 = vxpose.xlu0.b32.cont [5/16] 0.0, 128
        %319 = vxpose.xlu0.b32.cont [6/16] 0.0, 128
        %320 = vxpose.xlu0.b32.cont [7/16] 0.0, 128
        %321 = vxpose.xlu0.b32.cont [8/16] 0.0, 128
        %322 = vxpose.xlu0.b32.cont [9/16] 0.0, 128
        %323 = vxpose.xlu0.b32.cont [10/16] 0.0, 128
        %324 = vxpose.xlu0.b32.cont [11/16] 0.0, 128
        %325 = vxpose.xlu0.b32.cont [12/16] 0.0, 128
        %326 = vxpose.xlu0.b32.cont [13/16] 0.0, 128
        %327 = vxpose.xlu0.b32.cont [14/16] 0.0, 128
        %328 = vxpose.xlu0.b32.cont [15/16] 0.0, 128
        %329 = vxpose.xlu0.b32.end [16/16] 0.0, 128
        %v330 = vpop.trf.xlu0
        %v331 = vpop.trf.xlu0
        %v332 = vpop.trf.xlu0
        %v333 = vpop.trf.xlu0
        %v334 = vpop.trf.xlu0
        %v335 = vpop.trf.xlu0
        %v336 = vpop.trf.xlu0
        %v337 = vpop.trf.xlu0
        %v338 = vpop.trf.xlu0
        %v339 = vpop.trf.xlu0
        %v340 = vpop.trf.xlu0
        %v341 = vpop.trf.xlu0
        %v342 = vpop.trf.xlu0
        %v343 = vpop.trf.xlu0
        %v344 = vpop.trf.xlu0
        %v345 = vpop.trf.xlu0
        %vm346 = vcmask 64512
        %v348 = vsel %vm346, %v330, 0
        %v351 = vsel %vm346, %v331, 0
        %353 = vmatprep.subr.mxu0 0.0
        %354 = vmatpush1.msra.mxu0 %v312
        %355 = vmatprep.subr.mxu0 0.0
        %356 = vmatpush1.msra.mxu0 0.0
        %357 = vmatprep.subr.mxu0 0.0
        %358 = vmatpush1.msra.mxu0 0.0
        %359 = vmatprep.subr.mxu0 0.0
        %360 = vmatpush1.msra.mxu0 0.0
        %361 = vmatprep.subr.mxu0 0.0
        %362 = vmatpush1.msra.mxu0 0.0
        %363 = vmatprep.subr.mxu0 0.0
        %364 = vmatpush1.msra.mxu0 0.0
        %365 = vmatprep.subr.mxu0 0.0
        %366 = vmatpush1.msra.mxu0 0.0
        %367 = vmatprep.subr.mxu0 0.0
        %368 = vmatpush1.msra.mxu0 0.0
        %369 = vmatprep.subr.mxu0 0.0
        %370 = vmatpush1.msra.mxu0 0.0
        %371 = vmatprep.subr.mxu0 0.0
        %372 = vmatpush1.msra.mxu0 0.0
        %373 = vmatprep.subr.mxu0 0.0
        %374 = vmatpush1.msra.mxu0 0.0
        %375 = vmatprep.subr.mxu0 0.0
        %376 = vmatpush1.msra.mxu0 0.0
        %377 = vmatprep.subr.mxu0 0.0
        %378 = vmatpush1.msra.mxu0 0.0
        %379 = vmatprep.subr.mxu0 0.0
        %380 = vmatpush1.msra.mxu0 0.0
        %381 = vmatprep.subr.mxu0 0.0
        %382 = vmatpush1.msra.mxu0 0.0
        %383 = vmatprep.subr.mxu0 0.0
        %384 = vmatpush1.msra.mxu0 0.0
        %385 = vmatprep.subr.mxu0 0.0
        %386 = vmatpush1.msra.mxu0 0.0
        %387 = vmatprep.subr.mxu0 0.0
        %388 = vmatpush1.msra.mxu0 0.0
        %389 = vmatprep.subr.mxu0 0.0
        %390 = vmatpush1.msra.mxu0 0.0
        %391 = vmatprep.subr.mxu0 0.0
        %392 = vmatpush1.msra.mxu0 0.0
        %393 = vmatprep.subr.mxu0 0.0
        %394 = vmatpush1.msra.mxu0 0.0
        %395 = vmatprep.subr.mxu0 0.0
        %396 = vmatpush1.msra.mxu0 0.0
        %397 = vmatprep.subr.mxu0 0.0
        %398 = vmatpush1.msra.mxu0 0.0
        %399 = vmatprep.subr.mxu0 0.0
        %400 = vmatpush1.msra.mxu0 0.0
        %401 = vmatprep.subr.mxu0 0.0
        %402 = vmatpush1.msra.mxu0 0.0
        %403 = vmatprep.subr.mxu0 0.0
        %404 = vmatpush1.msra.mxu0 0.0
        %405 = vmatprep.subr.mxu0 0.0
        %406 = vmatpush1.msra.mxu0 0.0
        %407 = vmatprep.subr.mxu0 0.0
        %408 = vmatpush1.msra.mxu0 0.0
        %409 = vmatprep.subr.mxu0 0.0
        %410 = vmatpush1.msra.mxu0 0.0
        %411 = vmatprep.subr.mxu0 0.0
        %412 = vmatpush1.msra.mxu0 0.0
        %413 = vmatprep.subr.mxu0 0.0
        %414 = vmatpush1.msra.mxu0 0.0
        %415 = vmatprep.subr.mxu0 0.0
        %416 = vmatpush1.msra.mxu0 0.0
        %417 = vmatprep.mubr.f32.mxu0 0.0
        %418 = vmatmul.mubr.f32.gmra.mrb[0].mxu0 %v348
        %v419 = vpop.f32.mrb[0].mxu0
        %v420 = vadd.f32 0.0, %v419
        %v421 = vpop.f32.mrb[0].mxu0
        %422 = vmatprep.mubr.f32.mxu0 0.0
        %423 = vmatmul.mubr.f32.gmra.mrb[0].mxu0 %v351
        %v424 = vpop.f32.mrb[0].mxu0
        %v425 = vadd.f32 0.0, %v424
        %v426 = vpop.f32.mrb[0].mxu0
        %427 = vdwg.mxu0
        %vm428 = vcmask 130048
        %v429 = vsel %vm428, %v420, -inf
        %430 = vmax.xlane.f32.xlu0 %v429
        %v431 = vpop.xlane.xlu0 %430
        %v432 = vsel %vm428, %v425, -inf
        %433 = vmax.xlane.f32.xlu0 %v432
        %v434 = vpop.xlane.xlu0 %433
        %v435 = vsub.f32 %v420, %v431
        %v436 = vsub.f32 %v425, %v434
        %v437 = vmul.f32 %v435, 1.442695
        %v438 = vpow.pop %v437
        %v439 = vmul.f32 %v436, 1.442695
        %v440 = vpow.pop %v439
        %v441 = vsel %vm428, %v438, 0.0
        %442 = vadd.xlane.f32.xlu0 %v441
        %v443 = vpop.xlane.xlu0 %442
        %v444 = vsel %vm428, %v440, 0.0
        %445 = vadd.xlane.f32.xlu0 %v444
        %v446 = vpop.xlane.xlu0 %445
        %v448 = vsel %vm428, %v313, 0
        %v451 = vsel %vm428, %v438, 0
        %v454 = vsel %vm428, %v440, 0
        %456 = vmatprep.subr.mxu0 0.0
        %457 = vmatpush1.xpose.msra.mxu0 %v451
        %458 = vmatprep.subr.mxu0 0.0
        %459 = vmatpush1.xpose.msra.mxu0 %v454
        %460 = vmatprep.subr.mxu0 0.0
        %461 = vmatpush1.xpose.msra.mxu0 0.0
        %462 = vmatprep.subr.mxu0 0.0
        %463 = vmatpush1.xpose.msra.mxu0 0.0
        %464 = vmatprep.subr.mxu0 0.0
        %465 = vmatpush1.xpose.msra.mxu0 0.0
        %466 = vmatprep.subr.mxu0 0.0
        %467 = vmatpush1.xpose.msra.mxu0 0.0
        %468 = vmatprep.subr.mxu0 0.0
        %469 = vmatpush1.xpose.msra.mxu0 0.0
        %470 = vmatprep.subr.mxu0 0.0
        %471 = vmatpush1.xpose.msra.mxu0 0.0
        %472 = vmatprep.subr.mxu0 0.0
        %473 = vmatpush1.xpose.msra.mxu0 0.0
        %474 = vmatprep.subr.mxu0 0.0
        %475 = vmatpush1.xpose.msra.mxu0 0.0
        %476 = vmatprep.subr.mxu0 0.0
        %477 = vmatpush1.xpose.msra.mxu0 0.0
        %478 = vmatprep.subr.mxu0 0.0
        %479 = vmatpush1.xpose.msra.mxu0 0.0
        %480 = vmatprep.subr.mxu0 0.0
        %481 = vmatpush1.xpose.msra.mxu0 0.0
        %482 = vmatprep.subr.mxu0 0.0
        %483 = vmatpush1.xpose.msra.mxu0 0.0
        %484 = vmatprep.subr.mxu0 0.0
        %485 = vmatpush1.xpose.msra.mxu0 0.0
        %486 = vmatprep.subr.mxu0 0.0
        %487 = vmatpush1.xpose.msra.mxu0 0.0
        %488 = vmatprep.subr.mxu0 0.0
        %489 = vmatpush1.xpose.msra.mxu0 0.0
        %490 = vmatprep.subr.mxu0 0.0
        %491 = vmatpush1.xpose.msra.mxu0 0.0
        %492 = vmatprep.subr.mxu0 0.0
        %493 = vmatpush1.xpose.msra.mxu0 0.0
        %494 = vmatprep.subr.mxu0 0.0
        %495 = vmatpush1.xpose.msra.mxu0 0.0
        %496 = vmatprep.subr.mxu0 0.0
        %497 = vmatpush1.xpose.msra.mxu0 0.0
        %498 = vmatprep.subr.mxu0 0.0
        %499 = vmatpush1.xpose.msra.mxu0 0.0
        %500 = vmatprep.subr.mxu0 0.0
        %501 = vmatpush1.xpose.msra.mxu0 0.0
        %502 = vmatprep.subr.mxu0 0.0
        %503 = vmatpush1.xpose.msra.mxu0 0.0
        %504 = vmatprep.subr.mxu0 0.0
        %505 = vmatpush1.xpose.msra.mxu0 0.0
        %506 = vmatprep.subr.mxu0 0.0
        %507 = vmatpush1.xpose.msra.mxu0 0.0
        %508 = vmatprep.subr.mxu0 0.0
        %509 = vmatpush1.xpose.msra.mxu0 0.0
        %510 = vmatprep.subr.mxu0 0.0
        %511 = vmatpush1.xpose.msra.mxu0 0.0
        %512 = vmatprep.subr.mxu0 0.0
        %513 = vmatpush1.xpose.msra.mxu0 0.0
        %514 = vmatprep.subr.mxu0 0.0
        %515 = vmatpush1.xpose.msra.mxu0 0.0
        %516 = vmatprep.subr.mxu0 0.0
        %517 = vmatpush1.xpose.msra.mxu0 0.0
        %518 = vmatprep.subr.mxu0 0.0
        %519 = vmatpush1.xpose.msra.mxu0 0.0
        %520 = vmatprep.mubr.f32.mxu0 0.0
        %521 = vmatmul.mubr.f32.gmra.mrb[0].mxu0 %v448
        %v522 = vpop.f32.mrb[0].mxu0
        %v523 = vadd.f32 0.0, %v522
        %v524 = vpop.f32.mrb[0].mxu0
        %525 = vdwg.mxu0
        %v526 = vrcp.pop %v443
        %v527 = vmul.f32 1.0, %v526
        %v528 = vrcp.pop %v446
        %v529 = vmul.f32 1.0, %v528
        %v532 = vlaneseq
        %v533 = vand.u32 %v532, 127
        %v534 = vlaneseq
        %v535 = vshrl.u32 %v534, 7
        %v536 = vsub.s32 %v533, %v535
        %v537 = vrot.slane %v527, %v536
        %v538 = vadd.s32 %v533, 4294967288
        %v539 = vlaneseq
        %v540 = vshrl.u32 %v539, 7
        %v541 = vsub.s32 %v538, %v540
        %v542 = vrot.slane %v529, %v541
        %vm543 = vcmask 130112
        %v544 = vsel %vm543, %v542, %v537
        %vm545 = vcmask 1042434
        %v546 = vsel %vm545, %v544, %v544
        %vm547 = vcmask 1043459
        %v548 = vsel %vm547, %v544, %v546
        %vm549 = vcmask 1044484
        %v550 = vsel %vm549, %v544, %v548
        %vm551 = vcmask 1045509
        %v552 = vsel %vm551, %v544, %v550
        %vm553 = vcmask 1046534
        %v554 = vsel %vm553, %v544, %v552
        %vm555 = vcmask 1047559
        %v556 = vsel %vm555, %v544, %v554
        %v558 = vmul.f32 %v523, %v556
        %559 = vst.msk [vmem:[%s305] sm:$0xff] %vm428, %v558
        %s560 = scalar_lea.vmem %s255, 8 [#allocation2]
        %v561 = vld [vmem:[%s560] sm:$0xff]
        %v562 = vmul.f32 %v561, 0.35355338
        %s563 = scalar_lea.vmem %s264, 8 [#allocation5]
        %v564 = vld [vmem:[%s563] sm:$0xff]
        %s565 = scalar_lea.vmem %s273, 8 [#allocation7]
        %v566 = vld [vmem:[%s565] sm:$0xff]
        %567 = vxpose.xlu0.b32.start [1/16] %v562, 128
        %568 = vxpose.xlu0.b32.cont [2/16] 0.0, 128
        %569 = vxpose.xlu0.b32.cont [3/16] 0.0, 128
        %570 = vxpose.xlu0.b32.cont [4/16] 0.0, 128
        %571 = vxpose.xlu0.b32.cont [5/16] 0.0, 128
        %572 = vxpose.xlu0.b32.cont [6/16] 0.0, 128
        %573 = vxpose.xlu0.b32.cont [7/16] 0.0, 128
        %574 = vxpose.xlu0.b32.cont [8/16] 0.0, 128
        %575 = vxpose.xlu0.b32.cont [9/16] 0.0, 128
        %576 = vxpose.xlu0.b32.cont [10/16] 0.0, 128
        %577 = vxpose.xlu0.b32.cont [11/16] 0.0, 128
        %578 = vxpose.xlu0.b32.cont [12/16] 0.0, 128
        %579 = vxpose.xlu0.b32.cont [13/16] 0.0, 128
        %580 = vxpose.xlu0.b32.cont [14/16] 0.0, 128
        %581 = vxpose.xlu0.b32.cont [15/16] 0.0, 128
        %582 = vxpose.xlu0.b32.end [16/16] 0.0, 128
        %v583 = vpop.trf.xlu0
        %v584 = vpop.trf.xlu0
        %v585 = vpop.trf.xlu0
        %v586 = vpop.trf.xlu0
        %v587 = vpop.trf.xlu0
        %v588 = vpop.trf.xlu0
        %v589 = vpop.trf.xlu0
        %v590 = vpop.trf.xlu0
        %v591 = vpop.trf.xlu0
        %v592 = vpop.trf.xlu0
        %v593 = vpop.trf.xlu0
        %v594 = vpop.trf.xlu0
        %v595 = vpop.trf.xlu0
        %v596 = vpop.trf.xlu0
        %v597 = vpop.trf.xlu0
        %v598 = vpop.trf.xlu0
        %v600 = vsel %vm346, %v583, 0
        %v603 = vsel %vm346, %v584, 0
        %605 = vmatprep.subr.mxu0 0.0
        %606 = vmatpush1.msra.mxu0 %v564
        %607 = vmatprep.subr.mxu0 0.0
        %608 = vmatpush1.msra.mxu0 0.0
        %609 = vmatprep.subr.mxu0 0.0
        %610 = vmatpush1.msra.mxu0 0.0
        %611 = vmatprep.subr.mxu0 0.0
        %612 = vmatpush1.msra.mxu0 0.0
        %613 = vmatprep.subr.mxu0 0.0
        %614 = vmatpush1.msra.mxu0 0.0
        %615 = vmatprep.subr.mxu0 0.0
        %616 = vmatpush1.msra.mxu0 0.0
        %617 = vmatprep.subr.mxu0 0.0
        %618 = vmatpush1.msra.mxu0 0.0
        %619 = vmatprep.subr.mxu0 0.0
        %620 = vmatpush1.msra.mxu0 0.0
        %621 = vmatprep.subr.mxu0 0.0
        %622 = vmatpush1.msra.mxu0 0.0
        %623 = vmatprep.subr.mxu0 0.0
        %624 = vmatpush1.msra.mxu0 0.0
        %625 = vmatprep.subr.mxu0 0.0
        %626 = vmatpush1.msra.mxu0 0.0
        %627 = vmatprep.subr.mxu0 0.0
        %628 = vmatpush1.msra.mxu0 0.0
        %629 = vmatprep.subr.mxu0 0.0
        %630 = vmatpush1.msra.mxu0 0.0
        %631 = vmatprep.subr.mxu0 0.0
        %632 = vmatpush1.msra.mxu0 0.0
        %633 = vmatprep.subr.mxu0 0.0
        %634 = vmatpush1.msra.mxu0 0.0
        %635 = vmatprep.subr.mxu0 0.0
        %636 = vmatpush1.msra.mxu0 0.0
        %637 = vmatprep.subr.mxu0 0.0
        %638 = vmatpush1.msra.mxu0 0.0
        %639 = vmatprep.subr.mxu0 0.0
        %640 = vmatpush1.msra.mxu0 0.0
        %641 = vmatprep.subr.mxu0 0.0
        %642 = vmatpush1.msra.mxu0 0.0
        %643 = vmatprep.subr.mxu0 0.0
        %644 = vmatpush1.msra.mxu0 0.0
        %645 = vmatprep.subr.mxu0 0.0
        %646 = vmatpush1.msra.mxu0 0.0
        %647 = vmatprep.subr.mxu0 0.0
        %648 = vmatpush1.msra.mxu0 0.0
        %649 = vmatprep.subr.mxu0 0.0
        %650 = vmatpush1.msra.mxu0 0.0
        %651 = vmatprep.subr.mxu0 0.0
        %652 = vmatpush1.msra.mxu0 0.0
        %653 = vmatprep.subr.mxu0 0.0
        %654 = vmatpush1.msra.mxu0 0.0
        %655 = vmatprep.subr.mxu0 0.0
        %656 = vmatpush1.msra.mxu0 0.0
        %657 = vmatprep.subr.mxu0 0.0
        %658 = vmatpush1.msra.mxu0 0.0
        %659 = vmatprep.subr.mxu0 0.0
        %660 = vmatpush1.msra.mxu0 0.0
        %661 = vmatprep.subr.mxu0 0.0
        %662 = vmatpush1.msra.mxu0 0.0
        %663 = vmatprep.subr.mxu0 0.0
        %664 = vmatpush1.msra.mxu0 0.0
        %665 = vmatprep.subr.mxu0 0.0
        %666 = vmatpush1.msra.mxu0 0.0
        %667 = vmatprep.subr.mxu0 0.0
        %668 = vmatpush1.msra.mxu0 0.0
        %669 = vmatprep.mubr.f32.mxu0 0.0
        %670 = vmatmul.mubr.f32.gmra.mrb[0].mxu0 %v600
        %v671 = vpop.f32.mrb[0].mxu0
        %v672 = vadd.f32 0.0, %v671
        %v673 = vpop.f32.mrb[0].mxu0
        %674 = vmatprep.mubr.f32.mxu0 0.0
        %675 = vmatmul.mubr.f32.gmra.mrb[0].mxu0 %v603
        %v676 = vpop.f32.mrb[0].mxu0
        %v677 = vadd.f32 0.0, %v676
        %v678 = vpop.f32.mrb[0].mxu0
        %679 = vdwg.mxu0
        %v680 = vsel %vm428, %v672, -inf
        %681 = vmax.xlane.f32.xlu0 %v680
        %v682 = vpop.xlane.xlu0 %681
        %v683 = vsel %vm428, %v677, -inf
        %684 = vmax.xlane.f32.xlu0 %v683
        %v685 = vpop.xlane.xlu0 %684
        %v686 = vsub.f32 %v672, %v682
        %v687 = vsub.f32 %v677, %v685
        %v688 = vmul.f32 %v686, 1.442695
        %v689 = vpow.pop %v688
        %v690 = vmul.f32 %v687, 1.442695
        %v691 = vpow.pop %v690
        %v692 = vsel %vm428, %v689, 0.0
        %693 = vadd.xlane.f32.xlu0 %v692
        %v694 = vpop.xlane.xlu0 %693
        %v695 = vsel %vm428, %v691, 0.0
        %696 = vadd.xlane.f32.xlu0 %v695
        %v697 = vpop.xlane.xlu0 %696
        %v699 = vsel %vm428, %v566, 0
        %v702 = vsel %vm428, %v689, 0
        %v705 = vsel %vm428, %v691, 0
        %707 = vmatprep.subr.mxu0 0.0
        %708 = vmatpush1.xpose.msra.mxu0 %v702
        %709 = vmatprep.subr.mxu0 0.0
        %710 = vmatpush1.xpose.msra.mxu0 %v705
        %711 = vmatprep.subr.mxu0 0.0
        %712 = vmatpush1.xpose.msra.mxu0 0.0
        %713 = vmatprep.subr.mxu0 0.0
        %714 = vmatpush1.xpose.msra.mxu0 0.0
        %715 = vmatprep.subr.mxu0 0.0
        %716 = vmatpush1.xpose.msra.mxu0 0.0
        %717 = vmatprep.subr.mxu0 0.0
        %718 = vmatpush1.xpose.msra.mxu0 0.0
        %719 = vmatprep.subr.mxu0 0.0
        %720 = vmatpush1.xpose.msra.mxu0 0.0
        %721 = vmatprep.subr.mxu0 0.0
        %722 = vmatpush1.xpose.msra.mxu0 0.0
        %723 = vmatprep.subr.mxu0 0.0
        %724 = vmatpush1.xpose.msra.mxu0 0.0
        %725 = vmatprep.subr.mxu0 0.0
        %726 = vmatpush1.xpose.msra.mxu0 0.0
        %727 = vmatprep.subr.mxu0 0.0
        %728 = vmatpush1.xpose.msra.mxu0 0.0
        %729 = vmatprep.subr.mxu0 0.0
        %730 = vmatpush1.xpose.msra.mxu0 0.0
        %731 = vmatprep.subr.mxu0 0.0
        %732 = vmatpush1.xpose.msra.mxu0 0.0
        %733 = vmatprep.subr.mxu0 0.0
        %734 = vmatpush1.xpose.msra.mxu0 0.0
        %735 = vmatprep.subr.mxu0 0.0
        %736 = vmatpush1.xpose.msra.mxu0 0.0
        %737 = vmatprep.subr.mxu0 0.0
        %738 = vmatpush1.xpose.msra.mxu0 0.0
        %739 = vmatprep.subr.mxu0 0.0
        %740 = vmatpush1.xpose.msra.mxu0 0.0
        %741 = vmatprep.subr.mxu0 0.0
        %742 = vmatpush1.xpose.msra.mxu0 0.0
        %743 = vmatprep.subr.mxu0 0.0
        %744 = vmatpush1.xpose.msra.mxu0 0.0
        %745 = vmatprep.subr.mxu0 0.0
        %746 = vmatpush1.xpose.msra.mxu0 0.0
        %747 = vmatprep.subr.mxu0 0.0
        %748 = vmatpush1.xpose.msra.mxu0 0.0
        %749 = vmatprep.subr.mxu0 0.0
        %750 = vmatpush1.xpose.msra.mxu0 0.0
        %751 = vmatprep.subr.mxu0 0.0
        %752 = vmatpush1.xpose.msra.mxu0 0.0
        %753 = vmatprep.subr.mxu0 0.0
        %754 = vmatpush1.xpose.msra.mxu0 0.0
        %755 = vmatprep.subr.mxu0 0.0
        %756 = vmatpush1.xpose.msra.mxu0 0.0
        %757 = vmatprep.subr.mxu0 0.0
        %758 = vmatpush1.xpose.msra.mxu0 0.0
        %759 = vmatprep.subr.mxu0 0.0
        %760 = vmatpush1.xpose.msra.mxu0 0.0
        %761 = vmatprep.subr.mxu0 0.0
        %762 = vmatpush1.xpose.msra.mxu0 0.0
        %763 = vmatprep.subr.mxu0 0.0
        %764 = vmatpush1.xpose.msra.mxu0 0.0
        %765 = vmatprep.subr.mxu0 0.0
        %766 = vmatpush1.xpose.msra.mxu0 0.0
        %767 = vmatprep.subr.mxu0 0.0
        %768 = vmatpush1.xpose.msra.mxu0 0.0
        %769 = vmatprep.subr.mxu0 0.0
        %770 = vmatpush1.xpose.msra.mxu0 0.0
        %771 = vmatprep.mubr.f32.mxu0 0.0
        %772 = vmatmul.mubr.f32.gmra.mrb[0].mxu0 %v699
        %v773 = vpop.f32.mrb[0].mxu0
        %v774 = vadd.f32 0.0, %v773
        %v775 = vpop.f32.mrb[0].mxu0
        %776 = vdwg.mxu0
        %v777 = vrcp.pop %v694
        %v778 = vmul.f32 1.0, %v777
        %v779 = vrcp.pop %v697
        %v780 = vmul.f32 1.0, %v779
        %v783 = vlaneseq
        %v784 = vshrl.u32 %v783, 7
        %v785 = vsub.s32 %v533, %v784
        %v786 = vrot.slane %v778, %v785
        %v787 = vlaneseq
        %v788 = vshrl.u32 %v787, 7
        %v789 = vsub.s32 %v538, %v788
        %v790 = vrot.slane %v780, %v789
        %v791 = vsel %vm543, %v790, %v786
        %v792 = vsel %vm545, %v791, %v791
        %v793 = vsel %vm547, %v791, %v792
        %v794 = vsel %vm549, %v791, %v793
        %v795 = vsel %vm551, %v791, %v794
        %v796 = vsel %vm553, %v791, %v795
        %v797 = vsel %vm555, %v791, %v796
        %v799 = vmul.f32 %v774, %v797
        %s800 = scalar_lea.vmem %s305, 8 [#allocation8]
        %801 = vst.msk [vmem:[%s800] sm:$0xff] %vm428, %v799
        %s802 = sand.u32 %s140, 1
        %s803 = scalar_lea.sflag [#allocation4], %s802
        %s804 = sand.u32 %s140, 1
        %s805 = smul.addr %s804, 16
        %s806 = scalar_lea.vmem [#allocation8], %s805
        // Predicated region
        $region45: #{tpu_custom_call.1} parent=31 // pred_check
          %p807 = pneg %p150
        $region46: #{tpu_custom_call.1} parent=31 // pred_check_branch
          %809 = sbr.rel (%p807) target = $region48
        $region47: #{tpu_custom_call.1} parent=31 // pred_region
          %s810 = smul.u32 2, %s29
          %s812 = ssub.s32 256, 256
          %813 = vsyncadd %s803, %s812
          %s814 = sadd.s32 %s30, %s810
          %s815 = smul.addr %s28, 2
          %s816 = sadd.s32 %s814, %s815
          %s817 = smul.addr %s816, 128
          %s818 = scalar_lea.hbm %s3, %s817
          %s819 = sshll.u32 %s806, 4
          %s820 = int_to_ptr.vmem [resolvable:$true] %s819
          %825 = dma.vmem_to_hbm [thread:$0]  %s820, 256, %s818, %s803, 128, 128, 8
        $region48: #{tpu_custom_call.1} parent=31 // pred_fallthru
          _
      $region32: #{tpu_custom_call.1} parent=5 // pred_fallthru
        _
      %p826 = scmp.le.s32.totalorder 2, %s18
      // Predicated region
      $region49: #{tpu_custom_call.1} parent=5 // pred_check
        %p827 = pneg %p826
      $region50: #{tpu_custom_call.1} parent=5 // pred_check_branch
        %829 = sbr.rel (%p827) target = $region52
      $region51: #{tpu_custom_call.1} parent=5 // pred_region
        %s830 = ssub.s32 %s18, 2
        // Predicated region
        $region53: #{tpu_custom_call.1} parent=51 // pred_check
          %p831 = pneg %p156
        $region54: #{tpu_custom_call.1} parent=51 // pred_check_branch
          %833 = sbr.rel (%p831) target = $region56
        $region55: #{tpu_custom_call.1} parent=51 // pred_region
          %s834 = sand.u32 %s141, 1
          %s835 = scalar_lea.sflag [#allocation4], %s834
          %s836 = sand.u32 %s141, 1
          %s837 = smul.addr %s836, 16
          %s838 = scalar_lea.vmem [#allocation8], %s837
          %839 = dma.done %s835, 256
        $region56: #{tpu_custom_call.1} parent=51 // pred_fallthru
          _
      $region52: #{tpu_custom_call.1} parent=5 // pred_fallthru
        _
    $region6: #{tpu_custom_call.1} parent=1 // loop_footer
      %s22 = sadd.s32 1, %s18
    $region7: #{tpu_custom_call.1} parent=1 // loop_footer_branch
      %17 = sbr.rel target = $region3
    $region8: #{tpu_custom_call.1} parent=1 // loop_exit
      _
    %840 = vsyncpa [#allocation3], 1
    %s841 = scalar_lea.sflag [#allocation3], 1
    %842 = vsyncpa %s841, 1
    %843 = vsyncpa [#allocation6], 1
    %s844 = scalar_lea.sflag [#allocation6], 1
    %845 = vsyncpa %s844, 1
    %846 = vsyncpa [#allocation4], 1
    %s847 = scalar_lea.sflag [#allocation4], 1
    %848 = vsyncpa %s847, 1

</llo_original>
